<compile_context>
chip_gen: v7x
topology: tpu7x:2x2x1
jax: 0.10.0
libtpu: 0.0.40
codegen_flags: <defaults>
</compile_context>

<pallas_src>
import numpy as np
import jax
import jax.numpy as jnp
from jax.experimental import pallas as pl
from jax.experimental.pallas import tpu as pltpu

# ----------------------------- configuration ------------------------------
BATCH    = 2
NEW_LEN  = 4
FEATURES = 32
PERIOD   = 4
PRED_LEN = NEW_LEN * PERIOD          # 16  (module invariant: pred_len = new_len*period)

VMEM = pl.BlockSpec(memory_space=pltpu.MemorySpace.VMEM)


# ------------------------------- kernel ------------------------------------
def fold_kernel(x_ref, o_ref):
    # x_ref and o_ref are the same flat (B, pred_len*features) slab layout:
    # the PyTorch reshape preserves row-major order, so the fold is exactly an
    # identity copy of the contiguous per-batch block.  Lane-dense full-tile
    # load + store; no relayout, no masked stores.
    o_ref[...] = x_ref[...]


# ------------------------------- wrapper ------------------------------------
def fold_back_to_sequence(x, pred_len):
    """Pallas equivalent of FoldBackToSequence(pred_len)(x).

    x: (batch, new_len, features, period)  ->  (batch, pred_len, features)
    """
    b, new_len, features, period = x.shape
    assert pred_len == new_len * period, "pred_len must equal new_len * period"

    # Free metadata reshape: merge the contiguous trailing dims into one lane axis.
    slab_in = x.reshape(b, new_len * features * period)        # (B, P*F)

    slab_out = pl.pallas_call(
        fold_kernel,
        out_shape=jax.ShapeDtypeStruct((b, pred_len * features), x.dtype),
        in_specs=[VMEM],
        out_specs=VMEM,
    )(slab_in)

    # Free metadata reshape: split the lane axis back into (pred_len, features).
    return slab_out.reshape(b, pred_len, features)


# ------------------------------ reference -----------------------------------
def reference_fold(x, pred_len):
    b = x.shape[0]
    features = x.shape[2]
    return x.reshape(b, pred_len, features)      # row-major, identical to torch.reshape


# --------------------------------- main --------------------------------------
if __name__ == "__main__":
    key = jax.random.PRNGKey(0)
    x = jax.random.normal(key, (BATCH, NEW_LEN, FEATURES, PERIOD), jnp.float32)

    fwd = jax.jit(fold_back_to_sequence, static_argnums=1)
    out = jax.block_until_ready(fwd(x, PRED_LEN))

    ref = reference_fold(x, PRED_LEN)
    assert out.shape == (BATCH, PRED_LEN, FEATURES)
    np.testing.assert_array_equal(np.asarray(out), np.asarray(ref))
    print("KERNEL_OK")
</pallas_src>

<mosaic_0001>
module attributes {stable_mosaic.version = 11 : i64} {
  func.func @fold_kernel(%arg0: memref<2x512xf32, #tpu.memory_space<vmem>>, %arg1: memref<2x512xf32, #tpu.memory_space<vmem>>) attributes {dimension_semantics = [], scalar_prefetch = 0 : i64, scratch_operands = 0 : i64, tpu.core_type = #tpu.core_type<tc>} {
    %c0 = arith.constant 0 : index
    %c0_0 = arith.constant 0 : index
    %0 = vector.load %arg0[%c0, %c0_0] : memref<2x512xf32, #tpu.memory_space<vmem>>, vector<2x512xf32>
    %c0_1 = arith.constant 0 : index
    %c0_2 = arith.constant 0 : index
    %1 = vector.load %arg1[%c0_1, %c0_2] : memref<2x512xf32, #tpu.memory_space<vmem>>, vector<2x512xf32>
    tpu.vector_store %arg1[%c0_1, %c0_2], %0 {strides = array<i32>} : memref<2x512xf32, #tpu.memory_space<vmem>>, vector<2x512xf32>,
    return
  }
}

</mosaic_0001>

<llo_original>
// kernel: fold_back_to_sequence.1
$region0: #{fold_back_to_sequence.1}
  #allocation0 [shape = 'u32[]', space=smem, size = 0x4, offset = 0x4, fixed_abs, tag = 'smem constant byte address 0x4 - core index']
  #allocation1 [shape = 'u32[144,128]{1,0:T(1,128)}', space=vmem, size = 0x12000, scoped, tag = 'internal scratch']
  %s0 = inlined_call_operand.vmem [shape: f32[2,512], index: 0, kind: input, shape index: {}]
  %s1 = inlined_call_operand.vmem [shape: f32[2,512], index: 1, kind: output, shape index: {}]
  %s2 = sld [smem:[#allocation0]]
  $region14: #{fold_back_to_sequence.1} parent=0
    _
  %s4 = ssub.s32 1, %s2
  %s5 = scalar_select 0, %s4, %s2
  // Predicated region
  $region2: #{fold_back_to_sequence.1} parent=0 // pred_check
    _
  $region3: #{fold_back_to_sequence.1} parent=0 // pred_check_branch
    %7 = sbr.rel (0) target = $region5
  $region4: #{fold_back_to_sequence.1} parent=0 // pred_region
    _
  $region5: #{fold_back_to_sequence.1} parent=0 // pred_fallthru
    _
  %v8 = vld [vmem:[%s0] sm:$0xff]
  %9 = vst [vmem:[%s1] sm:$0xff] %v8
  // Predicated region
  $region6: #{fold_back_to_sequence.1} parent=0 // pred_check
    _
  $region7: #{fold_back_to_sequence.1} parent=0 // pred_check_branch
    %11 = sbr.rel (0) target = $region9
  $region8: #{fold_back_to_sequence.1} parent=0 // pred_region
    _
  $region9: #{fold_back_to_sequence.1} parent=0 // pred_fallthru
    _
  // Predicated region
  $region10: #{fold_back_to_sequence.1} parent=0 // pred_check
    _
  $region11: #{fold_back_to_sequence.1} parent=0 // pred_check_branch
    %13 = sbr.rel (0) target = $region13
  $region12: #{fold_back_to_sequence.1} parent=0 // pred_region
    _
  $region13: #{fold_back_to_sequence.1} parent=0 // pred_fallthru
    _

</llo_original>
